<compile_context>
chip_gen: v5e
topology: v5e:2x2
jax: 0.10.0
libtpu: 0.0.40
codegen_flags: <defaults>
</compile_context>

<pallas_src>
import jax
import jax.numpy as jnp
from jax.experimental import pallas as pl
from jax.experimental.pallas import tpu as pltpu


def _round_up(x, m):
    return ((x + m - 1) // m) * m


def dpq_kernel(codes_ref, cent_ref, out_ref):
    # codes_ref : (TN, M)        int32   (code == -1 marks padded / masked rows)
    # cent_ref  : (M*V, M*sub)   float32 block-diagonal centroid table
    # out_ref   : (TN, M*sub)    float32
    TN, M = codes_ref.shape
    V = cent_ref.shape[0] // M

    # Single iota, hoisted and shared across all M code bytes.
    iota = jax.lax.broadcasted_iota(jnp.int32, (TN, V), 1)

    # Per-byte one-hots (TN, V); concatenated into a (TN, M*V) multi-hot.
    hots = [
        (codes_ref[:, m:m + 1] == iota).astype(jnp.float32)  # (TN, V)
        for m in range(M)
    ]
    onehot = jnp.concatenate(hots, axis=1)                    # (TN, M*V)

    # One MXU contraction reproduces all M gathers at once and lands the result
    # already in the final (row, M*sub) layout (lane-dense output store).
    out_ref[...] = jnp.dot(onehot, cent_ref[...],
                           preferred_element_type=jnp.float32)


def item_code_dpq_forward(input_ids, item_codes, centroids, *, tile_n=512):
    """input_ids: (B, S) int32; item_codes: (num_items, M) int32;
    centroids: (M, V, sub) float32. Returns (B, S, M*sub) float32."""
    B, S = input_ids.shape
    M, V, sub = centroids.shape
    emb = M * sub
    N = B * S

    flat_ids = input_ids.reshape(N).astype(jnp.int32)

    # Glue: per-item code lookup (index plumbing), clamp, and mask folding.
    codes = jnp.minimum(item_codes[flat_ids].astype(jnp.int32), V - 1)   # (N, M)
    codes = jnp.where((flat_ids == 0)[:, None], jnp.int32(-1), codes)    # pad rows -> -1

    # Tile over N; keep TN a multiple of 8 (sublane) and pad N to a multiple of TN.
    TN = min(tile_n, _round_up(N, 8))
    N_pad = _round_up(N, TN)
    if N_pad != N:
        codes = jnp.pad(codes, ((0, N_pad - N), (0, 0)), constant_values=-1)

    # Block-diagonal centroid table (M*V, M*sub): column block m is centroids[m].
    cent_bd = jnp.zeros((M * V, emb), jnp.float32)
    for i in range(M):
        cent_bd = cent_bd.at[i * V:(i + 1) * V, i * sub:(i + 1) * sub].set(
            centroids[i].astype(jnp.float32))

    grid = (N_pad // TN,)
    cost = pl.CostEstimate(
        flops=int(2 * N_pad * (M * V) * emb),
        transcendentals=0,
        bytes_accessed=int(codes.size * 4 + cent_bd.size * 4 + N_pad * emb * 4),
    )

    out = pl.pallas_call(
        dpq_kernel,
        out_shape=jax.ShapeDtypeStruct((N_pad, emb), jnp.float32),
        grid=grid,
        in_specs=[
            pl.BlockSpec((TN, M), lambda i: (i, 0)),          # codes: tiled over N
            pl.BlockSpec((M * V, emb), lambda i: (0, 0)),     # centroids: resident
        ],
        out_specs=pl.BlockSpec((TN, emb), lambda i: (i, 0)),
        compiler_params=pltpu.CompilerParams(
            dimension_semantics=("parallel",)),
        cost_estimate=cost,
    )(codes, cent_bd)

    return out[:N].reshape(B, S, emb)


def ref_forward(input_ids, item_codes, centroids):
    """Pure-JAX reference mirroring the PyTorch forward."""
    M, V, sub = centroids.shape
    codes = jnp.minimum(item_codes[input_ids], V - 1)                 # (B, S, M)
    parts = [centroids[i][codes[..., i]] for i in range(M)]           # each (B, S, sub)
    res = jnp.concatenate(parts, axis=-1)                             # (B, S, M*sub)
    mask = (input_ids == 0)[..., None]
    return jnp.where(mask, 0.0, res)


if __name__ == "__main__":
    # small shapes consistent with the module
    pq_m = 4
    embedding_size = 32
    num_items = 50
    sequence_length = 8
    batch = 2
    vals_per_dim = 256

    sub_embedding_size = embedding_size // pq_m               # 8
    item_code_bytes = embedding_size // sub_embedding_size    # 4

    key = jax.random.PRNGKey(0)
    k1, k2, k3 = jax.random.split(key, 3)

    centroids = jax.random.normal(
        k1, (item_code_bytes, vals_per_dim, sub_embedding_size), dtype=jnp.float32)
    item_codes = jax.random.randint(
        k2, (num_items, item_code_bytes), 0, vals_per_dim, dtype=jnp.int32)

    input_ids = jax.random.randint(
        k3, (batch, sequence_length), 0, num_items, dtype=jnp.int32)
    input_ids = input_ids.at[0, 0].set(0)   # exercise the padding-mask path

    out = item_code_dpq_forward(input_ids, item_codes, centroids)
    out = jax.block_until_ready(out)

    ref = ref_forward(input_ids, item_codes, centroids)
    assert out.shape == (batch, sequence_length, embedding_size)
    if not bool(jnp.allclose(out, ref, atol=1e-5)):
        raise SystemExit("kernel/reference mismatch")

    print("KERNEL_OK")
</pallas_src>

<mosaic_0001>
module attributes {stable_mosaic.version = 11 : i64} {
  func.func @dpq_kernel(%arg0: i32, %arg1: memref<16x4xi32, #tpu.memory_space<vmem>>, %arg2: memref<1024x32xf32, #tpu.memory_space<vmem>>, %arg3: memref<16x32xf32, #tpu.memory_space<vmem>>) attributes {dimension_semantics = [#tpu.dimension_semantics<parallel>], iteration_bounds = array<i64: 1>, scalar_prefetch = 0 : i64, scratch_operands = 0 : i64, tpu.core_type = #tpu.core_type<tc>, window_params = [{transform_indices = @transform_0, window_bounds = array<i64: 16, 4>}, {pipeline_mode = #tpu.pipeline_mode<synchronous>, transform_indices = @transform_1, window_bounds = array<i64: 1024, 32>}, {transform_indices = @transform_2, window_bounds = array<i64: 16, 32>}]} {
    %0 = tpu.iota {dimensions = array<i32: 1>} : vector<16x256xi32>
    %c0 = arith.constant 0 : index
    %c0_0 = arith.constant 0 : index
    %1 = vector.load %arg1[%c0, %c0_0] : memref<16x4xi32, #tpu.memory_space<vmem>>, vector<16x1xi32>
    %2 = vector.broadcast %1 : vector<16x1xi32> to vector<16x256xi32>
    %3 = arith.cmpi eq, %2, %0 : vector<16x256xi32>
    %4 = arith.extui %3 : vector<16x256xi1> to vector<16x256xi32>
    %5 = arith.sitofp %4 : vector<16x256xi32> to vector<16x256xf32>
    %c0_1 = arith.constant 0 : index
    %c1 = arith.constant 1 : index
    %6 = vector.load %arg1[%c0_1, %c1] : memref<16x4xi32, #tpu.memory_space<vmem>>, vector<16x1xi32>
    %7 = vector.broadcast %6 : vector<16x1xi32> to vector<16x256xi32>
    %8 = arith.cmpi eq, %7, %0 : vector<16x256xi32>
    %9 = arith.extui %8 : vector<16x256xi1> to vector<16x256xi32>
    %10 = arith.sitofp %9 : vector<16x256xi32> to vector<16x256xf32>
    %c0_2 = arith.constant 0 : index
    %c2 = arith.constant 2 : index
    %11 = vector.load %arg1[%c0_2, %c2] : memref<16x4xi32, #tpu.memory_space<vmem>>, vector<16x1xi32>
    %12 = vector.broadcast %11 : vector<16x1xi32> to vector<16x256xi32>
    %13 = arith.cmpi eq, %12, %0 : vector<16x256xi32>
    %14 = arith.extui %13 : vector<16x256xi1> to vector<16x256xi32>
    %15 = arith.sitofp %14 : vector<16x256xi32> to vector<16x256xf32>
    %c0_3 = arith.constant 0 : index
    %c3 = arith.constant 3 : index
    %16 = vector.load %arg1[%c0_3, %c3] : memref<16x4xi32, #tpu.memory_space<vmem>>, vector<16x1xi32>
    %17 = vector.broadcast %16 : vector<16x1xi32> to vector<16x256xi32>
    %18 = arith.cmpi eq, %17, %0 : vector<16x256xi32>
    %19 = arith.extui %18 : vector<16x256xi1> to vector<16x256xi32>
    %20 = arith.sitofp %19 : vector<16x256xi32> to vector<16x256xf32>
    %21 = tpu.concatenate %5, %10, %15, %20 in 1 : vector<16x256xf32>, vector<16x256xf32>, vector<16x256xf32>, vector<16x256xf32> -> vector<16x1024xf32>
    %c0_4 = arith.constant 0 : index
    %c0_5 = arith.constant 0 : index
    %22 = vector.load %arg2[%c0_4, %c0_5] : memref<1024x32xf32, #tpu.memory_space<vmem>>, vector<1024x32xf32>
    %cst = arith.constant dense<0.000000e+00> : vector<16x32xf32>
    %23 = tpu.matmul %21, %22, %cst {dimension_numbers = #tpu.dot_dimension_numbers<[1], [0], [0], [1], [0, 0, 1, 1], [], []>} : vector<16x1024xf32>, vector<1024x32xf32>, vector<16x32xf32> -> vector<16x32xf32>
    %c0_6 = arith.constant 0 : index
    %c0_7 = arith.constant 0 : index
    %24 = vector.load %arg3[%c0_6, %c0_7] : memref<16x32xf32, #tpu.memory_space<vmem>>, vector<16x32xf32>
    tpu.vector_store %arg3[%c0_6, %c0_7], %23 {strides = array<i32>} : memref<16x32xf32, #tpu.memory_space<vmem>>, vector<16x32xf32>,
    return
  }
  func.func @transform_0(%arg0: i32) -> (i32, i32) {
    %c0_i32 = arith.constant 0 : i32
    %c0_i32_0 = arith.constant 0 : i32
    return %arg0, %c0_i32 : i32, i32
  }
  func.func @transform_1(%arg0: i32) -> (i32, i32) {
    %c0_i32 = arith.constant 0 : i32
    %c0_i32_0 = arith.constant 0 : i32
    %c0_i32_1 = arith.constant 0 : i32
    return %c0_i32, %c0_i32_0 : i32, i32
  }
  func.func @transform_2(%arg0: i32) -> (i32, i32) {
    %c0_i32 = arith.constant 0 : i32
    %c0_i32_0 = arith.constant 0 : i32
    return %arg0, %c0_i32 : i32, i32
  }
}

</mosaic_0001>

<llo_original>
// kernel: tpu_custom_call.1
$region0: #{tpu_custom_call.1}
  #allocation0 [shape = 'u32[]', space=smem, size = 0x4, offset = 0x4, fixed_abs, tag = 'smem constant byte address 0x4 - core index']
  #allocation1 [shape = 'u32[72,128]{1,0:T(1,128)}', space=vmem, size = 0x9000, scoped, tag = 'internal scratch']
  %s0 = inlined_call_operand.vmem [shape: s32[16,4], index: 0, kind: input, shape index: {}]
  %s1 = inlined_call_operand.vmem [shape: f32[1024,32], index: 1, kind: input, shape index: {}]
  %s2 = inlined_call_operand.hbm [shape: f32[16,32], index: 2, kind: output, shape index: {}]
  %s3 = sld [smem:[#allocation0]]
  $region18: #{tpu_custom_call.1} parent=0
    _
  %s5 = ssub.s32 1, %s3
  %s6 = scalar_select 0, %s5, %s3
  $region1: #{tpu_custom_call.1} parent=0
    #allocation2 [shape = 'u8[8192]{0}', space=vmem, size = 0x2000, scoped, tag = 'output window, operand 0, single buffered']
    #allocation3 [shape = 's32[1]{0}', space=sflag, size = 0x4, scoped, tag = 'scoped memory for tpu_custom_call.1']
    %7 = vsyncpa [#allocation3], 0
    // Predicated region
    $region2: #{tpu_custom_call.1} parent=1 // pred_check
      _
    $region3: #{tpu_custom_call.1} parent=1 // pred_check_branch
      %9 = sbr.rel (0) target = $region5
    $region4: #{tpu_custom_call.1} parent=1 // pred_region
      _
    $region5: #{tpu_custom_call.1} parent=1 // pred_fallthru
      _
    // Predicated region
    $region6: #{tpu_custom_call.1} parent=1 // pred_check
      _
    $region7: #{tpu_custom_call.1} parent=1 // pred_check_branch
      %11 = sbr.rel (0) target = $region9
    $region8: #{tpu_custom_call.1} parent=1 // pred_region
      _
    $region9: #{tpu_custom_call.1} parent=1 // pred_fallthru
      _
    %v12 = vlaneseq
    %v13 = vand.u32 %v12, 127
    %v14 = vadd.s32 %v13, 128
    %v15 = vld [vmem:[%s0] sm:$0xff]
    %v16 = vld [vmem:[%s0 + $0x8] sm:$0xff]
    %17 = vset.pattern.permute.xlu0 0
    %18 = vperm.xlu0 %17, %v15
    %v19 = vpop.permute.xlu0 %18
    %20 = vset.pattern.permute.xlu0 0
    %21 = vperm.xlu0 %20, %v16
    %v22 = vpop.permute.xlu0 %21
    %vm23 = vcmp.eq.s32.totalorder %v19, %v13
    %vm24 = vcmp.eq.s32.totalorder %v19, %v14
    %vm25 = vcmp.eq.s32.totalorder %v22, %v13
    %vm26 = vcmp.eq.s32.totalorder %v22, %v14
    %v27 = vsel %vm23, 1, 0
    %v28 = vsel %vm24, 1, 0
    %v29 = vsel %vm25, 1, 0
    %v30 = vsel %vm26, 1, 0
    %v31 = vcvt.s32.f32 %v27
    %v32 = vcvt.s32.f32 %v28
    %v33 = vcvt.s32.f32 %v29
    %v34 = vcvt.s32.f32 %v30
    %35 = vset.pattern.permute.xlu0 1
    %36 = vperm.xlu0 %35, %v15
    %v37 = vpop.permute.xlu0 %36
    %38 = vset.pattern.permute.xlu0 1
    %39 = vperm.xlu0 %38, %v16
    %v40 = vpop.permute.xlu0 %39
    %vm41 = vcmp.eq.s32.totalorder %v37, %v13
    %vm42 = vcmp.eq.s32.totalorder %v37, %v14
    %vm43 = vcmp.eq.s32.totalorder %v40, %v13
    %vm44 = vcmp.eq.s32.totalorder %v40, %v14
    %v45 = vsel %vm41, 1, 0
    %v46 = vsel %vm42, 1, 0
    %v47 = vsel %vm43, 1, 0
    %v48 = vsel %vm44, 1, 0
    %v49 = vcvt.s32.f32 %v45
    %v50 = vcvt.s32.f32 %v46
    %v51 = vcvt.s32.f32 %v47
    %v52 = vcvt.s32.f32 %v48
    %53 = vset.pattern.permute.xlu0 2
    %54 = vperm.xlu0 %53, %v15
    %v55 = vpop.permute.xlu0 %54
    %56 = vset.pattern.permute.xlu0 2
    %57 = vperm.xlu0 %56, %v16
    %v58 = vpop.permute.xlu0 %57
    %vm59 = vcmp.eq.s32.totalorder %v55, %v13
    %vm60 = vcmp.eq.s32.totalorder %v55, %v14
    %vm61 = vcmp.eq.s32.totalorder %v58, %v13
    %vm62 = vcmp.eq.s32.totalorder %v58, %v14
    %v63 = vsel %vm59, 1, 0
    %v64 = vsel %vm60, 1, 0
    %v65 = vsel %vm61, 1, 0
    %v66 = vsel %vm62, 1, 0
    %v67 = vcvt.s32.f32 %v63
    %v68 = vcvt.s32.f32 %v64
    %v69 = vcvt.s32.f32 %v65
    %v70 = vcvt.s32.f32 %v66
    %71 = vset.pattern.permute.xlu0 3
    %72 = vperm.xlu0 %71, %v15
    %v73 = vpop.permute.xlu0 %72
    %74 = vset.pattern.permute.xlu0 3
    %75 = vperm.xlu0 %74, %v16
    %v76 = vpop.permute.xlu0 %75
    %vm77 = vcmp.eq.s32.totalorder %v73, %v13
    %vm78 = vcmp.eq.s32.totalorder %v73, %v14
    %vm79 = vcmp.eq.s32.totalorder %v76, %v13
    %vm80 = vcmp.eq.s32.totalorder %v76, %v14
    %v81 = vsel %vm77, 1, 0
    %v82 = vsel %vm78, 1, 0
    %v83 = vsel %vm79, 1, 0
    %v84 = vsel %vm80, 1, 0
    %v85 = vcvt.s32.f32 %v81
    %v86 = vcvt.s32.f32 %v82
    %v87 = vcvt.s32.f32 %v83
    %v88 = vcvt.s32.f32 %v84
    %v89 = vld [vmem:[%s1] sm:$0xff]
    %v90 = vld [vmem:[%s1 + $0x8] sm:$0xff]
    %v91 = vld [vmem:[%s1 + $0x10] sm:$0xff]
    %v92 = vld [vmem:[%s1 + $0x18] sm:$0xff]
    %v93 = vld [vmem:[%s1 + $0x20] sm:$0xff]
    %v94 = vld [vmem:[%s1 + $0x28] sm:$0xff]
    %v95 = vld [vmem:[%s1 + $0x30] sm:$0xff]
    %v96 = vld [vmem:[%s1 + $0x38] sm:$0xff]
    %v97 = vld [vmem:[%s1 + $0x40] sm:$0xff]
    %v98 = vld [vmem:[%s1 + $0x48] sm:$0xff]
    %v99 = vld [vmem:[%s1 + $0x50] sm:$0xff]
    %v100 = vld [vmem:[%s1 + $0x58] sm:$0xff]
    %v101 = vld [vmem:[%s1 + $0x60] sm:$0xff]
    %v102 = vld [vmem:[%s1 + $0x68] sm:$0xff]
    %v103 = vld [vmem:[%s1 + $0x70] sm:$0xff]
    %v104 = vld [vmem:[%s1 + $0x78] sm:$0xff]
    %v105 = vld [vmem:[%s1 + $0x80] sm:$0xff]
    %v106 = vld [vmem:[%s1 + $0x88] sm:$0xff]
    %v107 = vld [vmem:[%s1 + $0x90] sm:$0xff]
    %v108 = vld [vmem:[%s1 + $0x98] sm:$0xff]
    %v109 = vld [vmem:[%s1 + $0xa0] sm:$0xff]
    %v110 = vld [vmem:[%s1 + $0xa8] sm:$0xff]
    %v111 = vld [vmem:[%s1 + $0xb0] sm:$0xff]
    %v112 = vld [vmem:[%s1 + $0xb8] sm:$0xff]
    %v113 = vld [vmem:[%s1 + $0xc0] sm:$0xff]
    %v114 = vld [vmem:[%s1 + $0xc8] sm:$0xff]
    %v115 = vld [vmem:[%s1 + $0xd0] sm:$0xff]
    %v116 = vld [vmem:[%s1 + $0xd8] sm:$0xff]
    %v117 = vld [vmem:[%s1 + $0xe0] sm:$0xff]
    %v118 = vld [vmem:[%s1 + $0xe8] sm:$0xff]
    %v119 = vld [vmem:[%s1 + $0xf0] sm:$0xff]
    %v120 = vld [vmem:[%s1 + $0xf8] sm:$0xff]
    %v121 = vld [vmem:[%s1 + $0x100] sm:$0xff]
    %v122 = vld [vmem:[%s1 + $0x108] sm:$0xff]
    %v123 = vld [vmem:[%s1 + $0x110] sm:$0xff]
    %v124 = vld [vmem:[%s1 + $0x118] sm:$0xff]
    %v125 = vld [vmem:[%s1 + $0x120] sm:$0xff]
    %v126 = vld [vmem:[%s1 + $0x128] sm:$0xff]
    %v127 = vld [vmem:[%s1 + $0x130] sm:$0xff]
    %v128 = vld [vmem:[%s1 + $0x138] sm:$0xff]
    %v129 = vld [vmem:[%s1 + $0x140] sm:$0xff]
    %v130 = vld [vmem:[%s1 + $0x148] sm:$0xff]
    %v131 = vld [vmem:[%s1 + $0x150] sm:$0xff]
    %v132 = vld [vmem:[%s1 + $0x158] sm:$0xff]
    %v133 = vld [vmem:[%s1 + $0x160] sm:$0xff]
    %v134 = vld [vmem:[%s1 + $0x168] sm:$0xff]
    %v135 = vld [vmem:[%s1 + $0x170] sm:$0xff]
    %v136 = vld [vmem:[%s1 + $0x178] sm:$0xff]
    %v137 = vld [vmem:[%s1 + $0x180] sm:$0xff]
    %v138 = vld [vmem:[%s1 + $0x188] sm:$0xff]
    %v139 = vld [vmem:[%s1 + $0x190] sm:$0xff]
    %v140 = vld [vmem:[%s1 + $0x198] sm:$0xff]
    %v141 = vld [vmem:[%s1 + $0x1a0] sm:$0xff]
    %v142 = vld [vmem:[%s1 + $0x1a8] sm:$0xff]
    %v143 = vld [vmem:[%s1 + $0x1b0] sm:$0xff]
    %v144 = vld [vmem:[%s1 + $0x1b8] sm:$0xff]
    %v145 = vld [vmem:[%s1 + $0x1c0] sm:$0xff]
    %v146 = vld [vmem:[%s1 + $0x1c8] sm:$0xff]
    %v147 = vld [vmem:[%s1 + $0x1d0] sm:$0xff]
    %v148 = vld [vmem:[%s1 + $0x1d8] sm:$0xff]
    %v149 = vld [vmem:[%s1 + $0x1e0] sm:$0xff]
    %v150 = vld [vmem:[%s1 + $0x1e8] sm:$0xff]
    %v151 = vld [vmem:[%s1 + $0x1f0] sm:$0xff]
    %v152 = vld [vmem:[%s1 + $0x1f8] sm:$0xff]
    %v153 = vld [vmem:[%s1 + $0x200] sm:$0xff]
    %v154 = vld [vmem:[%s1 + $0x208] sm:$0xff]
    %v155 = vld [vmem:[%s1 + $0x210] sm:$0xff]
    %v156 = vld [vmem:[%s1 + $0x218] sm:$0xff]
    %v157 = vld [vmem:[%s1 + $0x220] sm:$0xff]
    %v158 = vld [vmem:[%s1 + $0x228] sm:$0xff]
    %v159 = vld [vmem:[%s1 + $0x230] sm:$0xff]
    %v160 = vld [vmem:[%s1 + $0x238] sm:$0xff]
    %v161 = vld [vmem:[%s1 + $0x240] sm:$0xff]
    %v162 = vld [vmem:[%s1 + $0x248] sm:$0xff]
    %v163 = vld [vmem:[%s1 + $0x250] sm:$0xff]
    %v164 = vld [vmem:[%s1 + $0x258] sm:$0xff]
    %v165 = vld [vmem:[%s1 + $0x260] sm:$0xff]
    %v166 = vld [vmem:[%s1 + $0x268] sm:$0xff]
    %v167 = vld [vmem:[%s1 + $0x270] sm:$0xff]
    %v168 = vld [vmem:[%s1 + $0x278] sm:$0xff]
    %v169 = vld [vmem:[%s1 + $0x280] sm:$0xff]
    %v170 = vld [vmem:[%s1 + $0x288] sm:$0xff]
    %v171 = vld [vmem:[%s1 + $0x290] sm:$0xff]
    %v172 = vld [vmem:[%s1 + $0x298] sm:$0xff]
    %v173 = vld [vmem:[%s1 + $0x2a0] sm:$0xff]
    %v174 = vld [vmem:[%s1 + $0x2a8] sm:$0xff]
    %v175 = vld [vmem:[%s1 + $0x2b0] sm:$0xff]
    %v176 = vld [vmem:[%s1 + $0x2b8] sm:$0xff]
    %v177 = vld [vmem:[%s1 + $0x2c0] sm:$0xff]
    %v178 = vld [vmem:[%s1 + $0x2c8] sm:$0xff]
    %v179 = vld [vmem:[%s1 + $0x2d0] sm:$0xff]
    %v180 = vld [vmem:[%s1 + $0x2d8] sm:$0xff]
    %v181 = vld [vmem:[%s1 + $0x2e0] sm:$0xff]
    %v182 = vld [vmem:[%s1 + $0x2e8] sm:$0xff]
    %v183 = vld [vmem:[%s1 + $0x2f0] sm:$0xff]
    %v184 = vld [vmem:[%s1 + $0x2f8] sm:$0xff]
    %v185 = vld [vmem:[%s1 + $0x300] sm:$0xff]
    %v186 = vld [vmem:[%s1 + $0x308] sm:$0xff]
    %v187 = vld [vmem:[%s1 + $0x310] sm:$0xff]
    %v188 = vld [vmem:[%s1 + $0x318] sm:$0xff]
    %v189 = vld [vmem:[%s1 + $0x320] sm:$0xff]
    %v190 = vld [vmem:[%s1 + $0x328] sm:$0xff]
    %v191 = vld [vmem:[%s1 + $0x330] sm:$0xff]
    %v192 = vld [vmem:[%s1 + $0x338] sm:$0xff]
    %v193 = vld [vmem:[%s1 + $0x340] sm:$0xff]
    %v194 = vld [vmem:[%s1 + $0x348] sm:$0xff]
    %v195 = vld [vmem:[%s1 + $0x350] sm:$0xff]
    %v196 = vld [vmem:[%s1 + $0x358] sm:$0xff]
    %v197 = vld [vmem:[%s1 + $0x360] sm:$0xff]
    %v198 = vld [vmem:[%s1 + $0x368] sm:$0xff]
    %v199 = vld [vmem:[%s1 + $0x370] sm:$0xff]
    %v200 = vld [vmem:[%s1 + $0x378] sm:$0xff]
    %v201 = vld [vmem:[%s1 + $0x380] sm:$0xff]
    %v202 = vld [vmem:[%s1 + $0x388] sm:$0xff]
    %v203 = vld [vmem:[%s1 + $0x390] sm:$0xff]
    %v204 = vld [vmem:[%s1 + $0x398] sm:$0xff]
    %v205 = vld [vmem:[%s1 + $0x3a0] sm:$0xff]
    %v206 = vld [vmem:[%s1 + $0x3a8] sm:$0xff]
    %v207 = vld [vmem:[%s1 + $0x3b0] sm:$0xff]
    %v208 = vld [vmem:[%s1 + $0x3b8] sm:$0xff]
    %v209 = vld [vmem:[%s1 + $0x3c0] sm:$0xff]
    %v210 = vld [vmem:[%s1 + $0x3c8] sm:$0xff]
    %v211 = vld [vmem:[%s1 + $0x3d0] sm:$0xff]
    %v212 = vld [vmem:[%s1 + $0x3d8] sm:$0xff]
    %v213 = vld [vmem:[%s1 + $0x3e0] sm:$0xff]
    %v214 = vld [vmem:[%s1 + $0x3e8] sm:$0xff]
    %v215 = vld [vmem:[%s1 + $0x3f0] sm:$0xff]
    %v216 = vld [vmem:[%s1 + $0x3f8] sm:$0xff]
    %217 = vmatpush.msra.mxu0 %v104
    %218 = vmatpush.msra.mxu0 %v103
    %219 = vmatpush.msra.mxu0 %v102
    %220 = vmatpush.msra.mxu0 %v101
    %221 = vmatpush.msra.mxu0 %v100
    %222 = vmatpush.msra.mxu0 %v99
    %223 = vmatpush.msra.mxu0 %v98
    %224 = vmatpush.msra.mxu0 %v97
    %225 = vmatpush.msra.mxu0 %v96
    %226 = vmatpush.msra.mxu0 %v95
    %227 = vmatpush.msra.mxu0 %v94
    %228 = vmatpush.msra.mxu0 %v93
    %229 = vmatpush.msra.mxu0 %v92
    %230 = vmatpush.msra.mxu0 %v91
    %231 = vmatpush.msra.mxu0 %v90
    %232 = vmatpush.msra.mxu0 %v89
    %233 = vmatmul.f32.gmra.mxu0 %v31
    %v234 = vpop.f32.mrf.mxu0
    %v235 = vadd.f32 0.0, %v234
    %236 = vmatmul.f32.gmra.mxu0 %v33
    %v237 = vpop.f32.mrf.mxu0
    %v238 = vadd.f32 0.0, %v237
    %239 = vdwg.mxu0
    %240 = vmatpush.msra.mxu0 %v120
    %241 = vmatpush.msra.mxu0 %v119
    %242 = vmatpush.msra.mxu0 %v118
    %243 = vmatpush.msra.mxu0 %v117
    %244 = vmatpush.msra.mxu0 %v116
    %245 = vmatpush.msra.mxu0 %v115
    %246 = vmatpush.msra.mxu0 %v114
    %247 = vmatpush.msra.mxu0 %v113
    %248 = vmatpush.msra.mxu0 %v112
    %249 = vmatpush.msra.mxu0 %v111
    %250 = vmatpush.msra.mxu0 %v110
    %251 = vmatpush.msra.mxu0 %v109
    %252 = vmatpush.msra.mxu0 %v108
    %253 = vmatpush.msra.mxu0 %v107
    %254 = vmatpush.msra.mxu0 %v106
    %255 = vmatpush.msra.mxu0 %v105
    %256 = vmatmul.f32.gmra.mxu0 %v32
    %v257 = vpop.f32.mrf.mxu0
    %v258 = vadd.f32 %v235, %v257
    %259 = vmatmul.f32.gmra.mxu0 %v34
    %v260 = vpop.f32.mrf.mxu0
    %v261 = vadd.f32 %v238, %v260
    %262 = vdwg.mxu0
    %263 = vmatpush.msra.mxu0 %v136
    %264 = vmatpush.msra.mxu0 %v135
    %265 = vmatpush.msra.mxu0 %v134
    %266 = vmatpush.msra.mxu0 %v133
    %267 = vmatpush.msra.mxu0 %v132
    %268 = vmatpush.msra.mxu0 %v131
    %269 = vmatpush.msra.mxu0 %v130
    %270 = vmatpush.msra.mxu0 %v129
    %271 = vmatpush.msra.mxu0 %v128
    %272 = vmatpush.msra.mxu0 %v127
    %273 = vmatpush.msra.mxu0 %v126
    %274 = vmatpush.msra.mxu0 %v125
    %275 = vmatpush.msra.mxu0 %v124
    %276 = vmatpush.msra.mxu0 %v123
    %277 = vmatpush.msra.mxu0 %v122
    %278 = vmatpush.msra.mxu0 %v121
    %279 = vmatmul.f32.gmra.mxu0 %v49
    %v280 = vpop.f32.mrf.mxu0
    %v281 = vadd.f32 %v258, %v280
    %282 = vmatmul.f32.gmra.mxu0 %v51
    %v283 = vpop.f32.mrf.mxu0
    %v284 = vadd.f32 %v261, %v283
    %285 = vdwg.mxu0
    %286 = vmatpush.msra.mxu0 %v152
    %287 = vmatpush.msra.mxu0 %v151
    %288 = vmatpush.msra.mxu0 %v150
    %289 = vmatpush.msra.mxu0 %v149
    %290 = vmatpush.msra.mxu0 %v148
    %291 = vmatpush.msra.mxu0 %v147
    %292 = vmatpush.msra.mxu0 %v146
    %293 = vmatpush.msra.mxu0 %v145
    %294 = vmatpush.msra.mxu0 %v144
    %295 = vmatpush.msra.mxu0 %v143
    %296 = vmatpush.msra.mxu0 %v142
    %297 = vmatpush.msra.mxu0 %v141
    %298 = vmatpush.msra.mxu0 %v140
    %299 = vmatpush.msra.mxu0 %v139
    %300 = vmatpush.msra.mxu0 %v138
    %301 = vmatpush.msra.mxu0 %v137
    %302 = vmatmul.f32.gmra.mxu0 %v50
    %v303 = vpop.f32.mrf.mxu0
    %v304 = vadd.f32 %v281, %v303
    %305 = vmatmul.f32.gmra.mxu0 %v52
    %v306 = vpop.f32.mrf.mxu0
    %v307 = vadd.f32 %v284, %v306
    %308 = vdwg.mxu0
    %309 = vmatpush.msra.mxu0 %v168
    %310 = vmatpush.msra.mxu0 %v167
    %311 = vmatpush.msra.mxu0 %v166
    %312 = vmatpush.msra.mxu0 %v165
    %313 = vmatpush.msra.mxu0 %v164
    %314 = vmatpush.msra.mxu0 %v163
    %315 = vmatpush.msra.mxu0 %v162
    %316 = vmatpush.msra.mxu0 %v161
    %317 = vmatpush.msra.mxu0 %v160
    %318 = vmatpush.msra.mxu0 %v159
    %319 = vmatpush.msra.mxu0 %v158
    %320 = vmatpush.msra.mxu0 %v157
    %321 = vmatpush.msra.mxu0 %v156
    %322 = vmatpush.msra.mxu0 %v155
    %323 = vmatpush.msra.mxu0 %v154
    %324 = vmatpush.msra.mxu0 %v153
    %325 = vmatmul.f32.gmra.mxu0 %v67
    %v326 = vpop.f32.mrf.mxu0
    %v327 = vadd.f32 %v304, %v326
    %328 = vmatmul.f32.gmra.mxu0 %v69
    %v329 = vpop.f32.mrf.mxu0
    %v330 = vadd.f32 %v307, %v329
    %331 = vdwg.mxu0
    %332 = vmatpush.msra.mxu0 %v184
    %333 = vmatpush.msra.mxu0 %v183
    %334 = vmatpush.msra.mxu0 %v182
    %335 = vmatpush.msra.mxu0 %v181
    %336 = vmatpush.msra.mxu0 %v180
    %337 = vmatpush.msra.mxu0 %v179
    %338 = vmatpush.msra.mxu0 %v178
    %339 = vmatpush.msra.mxu0 %v177
    %340 = vmatpush.msra.mxu0 %v176
    %341 = vmatpush.msra.mxu0 %v175
    %342 = vmatpush.msra.mxu0 %v174
    %343 = vmatpush.msra.mxu0 %v173
    %344 = vmatpush.msra.mxu0 %v172
    %345 = vmatpush.msra.mxu0 %v171
    %346 = vmatpush.msra.mxu0 %v170
    %347 = vmatpush.msra.mxu0 %v169
    %348 = vmatmul.f32.gmra.mxu0 %v68
    %v349 = vpop.f32.mrf.mxu0
    %v350 = vadd.f32 %v327, %v349
    %351 = vmatmul.f32.gmra.mxu0 %v70
    %v352 = vpop.f32.mrf.mxu0
    %v353 = vadd.f32 %v330, %v352
    %354 = vdwg.mxu0
    %355 = vmatpush.msra.mxu0 %v200
    %356 = vmatpush.msra.mxu0 %v199
    %357 = vmatpush.msra.mxu0 %v198
    %358 = vmatpush.msra.mxu0 %v197
    %359 = vmatpush.msra.mxu0 %v196
    %360 = vmatpush.msra.mxu0 %v195
    %361 = vmatpush.msra.mxu0 %v194
    %362 = vmatpush.msra.mxu0 %v193
    %363 = vmatpush.msra.mxu0 %v192
    %364 = vmatpush.msra.mxu0 %v191
    %365 = vmatpush.msra.mxu0 %v190
    %366 = vmatpush.msra.mxu0 %v189
    %367 = vmatpush.msra.mxu0 %v188
    %368 = vmatpush.msra.mxu0 %v187
    %369 = vmatpush.msra.mxu0 %v186
    %370 = vmatpush.msra.mxu0 %v185
    %371 = vmatmul.f32.gmra.mxu0 %v85
    %v372 = vpop.f32.mrf.mxu0
    %v373 = vadd.f32 %v350, %v372
    %374 = vmatmul.f32.gmra.mxu0 %v87
    %v375 = vpop.f32.mrf.mxu0
    %v376 = vadd.f32 %v353, %v375
    %377 = vdwg.mxu0
    %378 = vmatpush.msra.mxu0 %v216
    %379 = vmatpush.msra.mxu0 %v215
    %380 = vmatpush.msra.mxu0 %v214
    %381 = vmatpush.msra.mxu0 %v213
    %382 = vmatpush.msra.mxu0 %v212
    %383 = vmatpush.msra.mxu0 %v211
    %384 = vmatpush.msra.mxu0 %v210
    %385 = vmatpush.msra.mxu0 %v209
    %386 = vmatpush.msra.mxu0 %v208
    %387 = vmatpush.msra.mxu0 %v207
    %388 = vmatpush.msra.mxu0 %v206
    %389 = vmatpush.msra.mxu0 %v205
    %390 = vmatpush.msra.mxu0 %v204
    %391 = vmatpush.msra.mxu0 %v203
    %392 = vmatpush.msra.mxu0 %v202
    %393 = vmatpush.msra.mxu0 %v201
    %394 = vmatmul.f32.gmra.mxu0 %v86
    %v395 = vpop.f32.mrf.mxu0
    %v396 = vadd.f32 %v373, %v395
    %397 = vmatmul.f32.gmra.mxu0 %v88
    %v398 = vpop.f32.mrf.mxu0
    %v399 = vadd.f32 %v376, %v398
    %400 = vdwg.mxu0
    %vm401 = vcmask 261120
    %402 = vst.msk [vmem:[#allocation2] sm:$0xff] %vm401, %v396
    %403 = vst.msk [vmem:[#allocation2 + $0x8] sm:$0xff] %vm401, %v399
    // Predicated region
    $region10: #{tpu_custom_call.1} parent=1 // pred_check
      _
    $region11: #{tpu_custom_call.1} parent=1 // pred_check_branch
      %405 = sbr.rel (0) target = $region13
    $region12: #{tpu_custom_call.1} parent=1 // pred_region
      %407 = vsyncadd [#allocation3], 0
      %s408 = sshll.u32 [#allocation2], 4
      %s409 = int_to_ptr.vmem [resolvable:$true] %s408
      %s410 = sshll.u32 %s2, 4
      %s411 = int_to_ptr.hbm [resolvable:$true] %s410
      %416 = dma.vmem_to_hbm [thread:$0]  %s409, 256, %s411, [#allocation3], 128, 128, 8
    $region13: #{tpu_custom_call.1} parent=1 // pred_fallthru
      _
    // Predicated region
    $region14: #{tpu_custom_call.1} parent=1 // pred_check
      _
    $region15: #{tpu_custom_call.1} parent=1 // pred_check_branch
      %418 = sbr.rel (0) target = $region17
    $region16: #{tpu_custom_call.1} parent=1 // pred_region
      %420 = dma.done [#allocation3], 256
    $region17: #{tpu_custom_call.1} parent=1 // pred_fallthru
      _
    %421 = vsyncpa [#allocation3], 1

</llo_original>
